<compile_context>
chip_gen: v7x
topology: tpu7x:2x2x1
jax: 0.10.0
libtpu: 0.0.40
codegen_flags: <defaults>
</compile_context>

<pallas_src>
import functools

import jax
import jax.numpy as jnp
from jax import lax
from jax.experimental import pallas as pl
from jax.experimental.pallas import tpu as pltpu


def _residual_unit_kernel(x_ref, w_ref, b_ref, o_ref, *, dilation, kernel_size, sample_len):
    # x_ref : (C, N*L)   batch flattened along the lane axis (also the residual branch)
    # w_ref : (C, K*C)   BN-folded im2col weights, W2[:, k*C + ci] = w'[:, ci, k]
    # b_ref : (C, 1)     BN-folded bias
    # o_ref : (C, N*L)
    C, NL = x_ref.shape
    K = kernel_size
    L = sample_len

    x = x_ref[...].astype(jnp.float32)                            # (C, N*L)

    # Within-sample position: masking with this guarantees the roll never carries data
    # across sample boundaries (or around the end of the flattened array).
    lane = lax.broadcasted_iota(jnp.int32, (C, NL), 1)
    pos = lane % L

    # Build the K dilated causal tap windows:
    #   window_k[c, n*L + t] = x[c, n*L + t - (K-1-k)*dilation], zero for t < shift.
    windows = []
    for k in range(K):                                            # K tiny & static -> unrolled
        shift = (K - 1 - k) * dilation
        if shift == 0:
            windows.append(x)
        else:
            rolled = pltpu.roll(x, shift=shift, axis=1)           # XLU lane rotate
            windows.append(jnp.where(pos >= shift, rolled, 0.0))  # causal zero-padding
    xcat = jnp.concatenate(windows, axis=0)                       # (K*C, N*L)

    # Entire dilated conv (+ folded BN scale) as a single MXU matmul over the whole batch.
    acc = jnp.dot(w_ref[...], xcat, preferred_element_type=jnp.float32)  # (C, N*L)

    y = jnp.maximum(acc + b_ref[...], 0.0)                        # folded bias + ReLU
    o_ref[...] = (x + y).astype(o_ref.dtype)                      # residual add


def residual_unit_forward(x, weight, bias, gamma, beta, running_mean, running_var,
                          *, dilation, eps=1e-5):
    """x: (N, C, L) float32; weight: (C_out, C_in, K). Returns (N, C, L)."""
    N, C, L = x.shape
    C_out, C_in, K = weight.shape
    assert C_out == C_in == C, "ResidualUnit needs in_channels == out_channels"

    f32 = lambda a: a.astype(jnp.float32)

    # Host-side O(C) BatchNorm folding.
    s = f32(gamma) * lax.rsqrt(f32(running_var) + eps)                   # (C,)
    w_folded = f32(weight) * s[:, None, None]                            # (C, C, K)
    b_folded = ((f32(bias) - f32(running_mean)) * s + f32(beta)).reshape(C, 1)
    # im2col weight layout: W2[:, k*C + ci] = w_folded[:, ci, k]
    w2 = jnp.transpose(w_folded, (0, 2, 1)).reshape(C, K * C)            # (C, K*C)

    # Flatten the batch into the lane axis: (N, C, L) -> (C, N*L).
    x2 = jnp.transpose(x, (1, 0, 2)).reshape(C, N * L).astype(jnp.float32)

    kernel = functools.partial(_residual_unit_kernel,
                               dilation=dilation, kernel_size=K, sample_len=L)

    out2 = pl.pallas_call(
        kernel,
        out_shape=jax.ShapeDtypeStruct((C, N * L), jnp.float32),
        in_specs=[
            pl.BlockSpec((C, N * L), lambda: (0, 0)),    # x (input + residual), lane-dense
            pl.BlockSpec((C, K * C), lambda: (0, 0)),    # folded weights (fetched once)
            pl.BlockSpec((C, 1), lambda: (0, 0)),        # folded bias
        ],
        out_specs=pl.BlockSpec((C, N * L), lambda: (0, 0)),
    )(x2, w2, b_folded)

    return jnp.transpose(out2.reshape(C, N, L), (1, 0, 2)).astype(x.dtype)


def residual_unit_reference(x, weight, bias, gamma, beta, running_mean, running_var,
                            *, dilation, eps=1e-5):
    """Pure-JAX reference (mirrors the PyTorch module in eval mode, unfolded)."""
    K = weight.shape[-1]
    pad = dilation * (K - 1)
    y = lax.conv_general_dilated(
        x, weight, window_strides=(1,), padding=[(pad, 0)],
        rhs_dilation=(dilation,),
        dimension_numbers=("NCH", "OIH", "NCH"))
    y = y + bias[None, :, None]
    y = (y - running_mean[None, :, None]) / jnp.sqrt(running_var[None, :, None] + eps)
    y = y * gamma[None, :, None] + beta[None, :, None]
    y = jnp.maximum(y, 0.0)
    return x + y


if __name__ == "__main__":
    # Small shapes implied by the module: ResidualUnit(in_channels=C, out_channels=C,
    # dilation=d, kernel_size=3) applied to x of shape (N, C, L).
    N, C, L = 2, 8, 128
    K = 3

    key = jax.random.PRNGKey(0)
    kx, kw, kb, kg, kbeta, km, kv = jax.random.split(key, 7)

    x = jax.random.normal(kx, (N, C, L), dtype=jnp.float32)
    weight = jax.random.normal(kw, (C, C, K), dtype=jnp.float32) * 0.1
    bias = jax.random.normal(kb, (C,), dtype=jnp.float32) * 0.1
    gamma = 1.0 + 0.1 * jax.random.normal(kg, (C,), dtype=jnp.float32)
    beta = 0.1 * jax.random.normal(kbeta, (C,), dtype=jnp.float32)
    running_mean = 0.1 * jax.random.normal(km, (C,), dtype=jnp.float32)
    running_var = 0.5 + jnp.abs(jax.random.normal(kv, (C,), dtype=jnp.float32))

    # dilation=2: the module's typical config; dilation=32: dilation*(K-1) = 64 >= L/2,
    # guards the roll-direction / causal-mask convention and the across-sample mask.
    for dil in (2, 32):
        out = residual_unit_forward(x, weight, bias, gamma, beta,
                                    running_mean, running_var, dilation=dil)
        out = jax.block_until_ready(out)

        ref = residual_unit_reference(x, weight, bias, gamma, beta,
                                      running_mean, running_var, dilation=dil)
        ref = jax.block_until_ready(ref)

        assert out.shape == (N, C, L)
        assert jnp.allclose(out, ref, atol=1e-4, rtol=1e-4), f"mismatch vs reference (dil={dil})"

    print("KERNEL_OK")
</pallas_src>

<mosaic_0001>
module attributes {stable_mosaic.version = 11 : i64} {
  func.func @_residual_unit_kernel(%arg0: memref<8x256xf32, #tpu.memory_space<vmem>>, %arg1: memref<8x24xf32, #tpu.memory_space<vmem>>, %arg2: memref<8x1xf32, #tpu.memory_space<vmem>>, %arg3: memref<8x256xf32, #tpu.memory_space<vmem>>) attributes {dimension_semantics = [], scalar_prefetch = 0 : i64, scratch_operands = 0 : i64, tpu.core_type = #tpu.core_type<tc>} {
    %c0 = arith.constant 0 : index
    %c0_0 = arith.constant 0 : index
    %0 = vector.load %arg0[%c0, %c0_0] : memref<8x256xf32, #tpu.memory_space<vmem>>, vector<8x256xf32>
    %1 = tpu.iota {dimensions = array<i32: 1>} : vector<8x256xi32>
    %c128_i32 = arith.constant 128 : i32
    %c0_i32 = arith.constant 0 : i32
    %2 = arith.cmpi eq, %c128_i32, %c0_i32 : i32
    %c1_i32 = arith.constant 1 : i32
    %3 = arith.select %2, %c1_i32, %c128_i32 : i32
    %4 = vector.broadcast %3 : i32 to vector<8x256xi32>
    %5 = arith.remsi %1, %4 : vector<8x256xi32>
    %c0_i32_1 = arith.constant 0 : i32
    %6 = vector.broadcast %c0_i32_1 : i32 to vector<8x256xi32>
    %7 = arith.cmpi ne, %5, %6 : vector<8x256xi32>
    %c0_i32_2 = arith.constant 0 : i32
    %8 = vector.broadcast %c0_i32_2 : i32 to vector<8x256xi32>
    %9 = arith.cmpi slt, %5, %8 : vector<8x256xi32>
    %c0_i32_3 = arith.constant 0 : i32
    %10 = arith.cmpi slt, %3, %c0_i32_3 : i32
    %11 = vector.broadcast %10 : i1 to vector<8x256xi1>
    %12 = vector.broadcast %11 : vector<8x256xi1> to vector<8x256xi1>
    %13 = arith.xori %9, %12 : vector<8x256xi1>
    %14 = arith.andi %13, %7 : vector<8x256xi1>
    %15 = vector.broadcast %3 : i32 to vector<8x256xi32>
    %16 = arith.addi %5, %15 : vector<8x256xi32>
    %17 = arith.select %14, %16, %5 : vector<8x256xi1>, vector<8x256xi32>
    %c4_i32 = arith.constant 4 : i32
    %18 = tpu.dynamic_rotate %0 by %c4_i32 dim 1 : vector<8x256xf32>, i32 -> vector<8x256xf32>
    %c4_i32_4 = arith.constant 4 : i32
    %19 = vector.broadcast %c4_i32_4 : i32 to vector<8x256xi32>
    %20 = arith.cmpi sge, %17, %19 : vector<8x256xi32>
    %cst = arith.constant 0.000000e+00 : f32
    %21 = vector.broadcast %cst : f32 to vector<8x256xf32>
    %22 = arith.select %20, %18, %21 : vector<8x256xi1>, vector<8x256xf32>
    %c2_i32 = arith.constant 2 : i32
    %23 = tpu.dynamic_rotate %0 by %c2_i32 dim 1 : vector<8x256xf32>, i32 -> vector<8x256xf32>
    %c2_i32_5 = arith.constant 2 : i32
    %24 = vector.broadcast %c2_i32_5 : i32 to vector<8x256xi32>
    %25 = arith.cmpi sge, %17, %24 : vector<8x256xi32>
    %cst_6 = arith.constant 0.000000e+00 : f32
    %26 = vector.broadcast %cst_6 : f32 to vector<8x256xf32>
    %27 = arith.select %25, %23, %26 : vector<8x256xi1>, vector<8x256xf32>
    %28 = tpu.concatenate %22, %27, %0 in 0 : vector<8x256xf32>, vector<8x256xf32>, vector<8x256xf32> -> vector<24x256xf32>
    %c0_7 = arith.constant 0 : index
    %c0_8 = arith.constant 0 : index
    %29 = vector.load %arg1[%c0_7, %c0_8] : memref<8x24xf32, #tpu.memory_space<vmem>>, vector<8x24xf32>
    %cst_9 = arith.constant dense<0.000000e+00> : vector<8x256xf32>
    %30 = tpu.matmul %29, %28, %cst_9 {dimension_numbers = #tpu.dot_dimension_numbers<[1], [0], [0], [1], [0, 0, 1, 1], [], []>} : vector<8x24xf32>, vector<24x256xf32>, vector<8x256xf32> -> vector<8x256xf32>
    %c0_10 = arith.constant 0 : index
    %c0_11 = arith.constant 0 : index
    %31 = vector.load %arg2[%c0_10, %c0_11] : memref<8x1xf32, #tpu.memory_space<vmem>>, vector<8x1xf32>
    %32 = vector.broadcast %31 : vector<8x1xf32> to vector<8x256xf32>
    %33 = arith.addf %30, %32 : vector<8x256xf32>
    %cst_12 = arith.constant 0.000000e+00 : f32
    %34 = vector.broadcast %cst_12 : f32 to vector<8x256xf32>
    %35 = arith.maximumf %33, %34 : vector<8x256xf32>
    %36 = arith.addf %0, %35 : vector<8x256xf32>
    %c0_13 = arith.constant 0 : index
    %c0_14 = arith.constant 0 : index
    %37 = vector.load %arg3[%c0_13, %c0_14] : memref<8x256xf32, #tpu.memory_space<vmem>>, vector<8x256xf32>
    tpu.vector_store %arg3[%c0_13, %c0_14], %36 {strides = array<i32>} : memref<8x256xf32, #tpu.memory_space<vmem>>, vector<8x256xf32>,
    return
  }
}

</mosaic_0001>

<llo_original>
// kernel: tpu_custom_call.1
$region0: #{tpu_custom_call.1}
  #allocation0 [shape = 'u32[]', space=smem, size = 0x4, offset = 0x4, fixed_abs, tag = 'smem constant byte address 0x4 - core index']
  #allocation1 [shape = 'u32[144,128]{1,0:T(1,128)}', space=vmem, size = 0x12000, scoped, tag = 'internal scratch']
  %s0 = inlined_call_operand.hbm [shape: f32[8,256], index: 0, kind: input, shape index: {}]
  %s1 = inlined_call_operand.vmem [shape: f32[8,24], index: 1, kind: input, shape index: {}]
  %s2 = inlined_call_operand.vmem [shape: f32[8,1], index: 2, kind: input, shape index: {}]
  %s3 = inlined_call_operand.hbm [shape: f32[8,256], index: 3, kind: output, shape index: {}]
  %s4 = sld [smem:[#allocation0]]
  $region26: #{tpu_custom_call.1} parent=0
    _
  %s6 = ssub.s32 1, %s4
  %s7 = scalar_select 0, %s6, %s4
  $region1: #{tpu_custom_call.1} parent=0
    #allocation2 [shape = 'u8[8192]{0}', space=vmem, size = 0x2000, scoped, tag = 'input window, operand 0, single buffered']
    #allocation3 [shape = 's32[1]{0}', space=sflag, size = 0x4, scoped, tag = 'scoped memory for tpu_custom_call.1']
    #allocation4 [shape = 's32[1]{0}', space=sflag, size = 0x4, scoped, tag = 'scoped memory for tpu_custom_call.1']
    #allocation5 [shape = 'u8[8192]{0}', space=vmem, size = 0x2000, scoped, tag = 'output window, operand 0, single buffered']
    %8 = vsyncpa [#allocation3], 0
    %9 = vsyncpa [#allocation4], 0
    // Predicated region
    $region2: #{tpu_custom_call.1} parent=1 // pred_check
      _
    $region3: #{tpu_custom_call.1} parent=1 // pred_check_branch
      %11 = sbr.rel (0) target = $region5
    $region4: #{tpu_custom_call.1} parent=1 // pred_region
      %s13 = ssub.s32 256, 256
      %14 = vsyncadd [#allocation3], %s13
      %s16 = sshll.u32 [#allocation2], 4
      %s17 = int_to_ptr.vmem [resolvable:$true] %s16
      %19 = dma.hbm_to_vmem [thread:$0]  %s0, 256, %s17, [#allocation3]
    $region5: #{tpu_custom_call.1} parent=1 // pred_fallthru
      _
    // Predicated region
    $region6: #{tpu_custom_call.1} parent=1 // pred_check
      _
    $region7: #{tpu_custom_call.1} parent=1 // pred_check_branch
      %21 = sbr.rel (0) target = $region9
    $region8: #{tpu_custom_call.1} parent=1 // pred_region
      _
    $region9: #{tpu_custom_call.1} parent=1 // pred_fallthru
      _
    // Predicated region
    $region10: #{tpu_custom_call.1} parent=1 // pred_check
      _
    $region11: #{tpu_custom_call.1} parent=1 // pred_check_branch
      %23 = sbr.rel (0) target = $region13
    $region12: #{tpu_custom_call.1} parent=1 // pred_region
      _
    $region13: #{tpu_custom_call.1} parent=1 // pred_fallthru
      _
    // Predicated region
    $region14: #{tpu_custom_call.1} parent=1 // pred_check
      _
    $region15: #{tpu_custom_call.1} parent=1 // pred_check_branch
      %25 = sbr.rel (0) target = $region17
    $region16: #{tpu_custom_call.1} parent=1 // pred_region
      %26 = dma.done [#allocation3], 256
    $region17: #{tpu_custom_call.1} parent=1 // pred_fallthru
      _
    %v27 = vld [vmem:[#allocation2] sm:$0xff]
    %v28 = vld [vmem:[#allocation2 + $0x8] sm:$0xff]
    %v29 = vlaneseq
    %v30 = vand.u32 %v29, 127
    %v31 = vadd.s32 %v30, 128
    %vm32 = vcmp.lt.s32.totalorder %v30, 0
    %v33 = vsub.s32 0, %v30
    %v34 = vsel %vm32, %v33, %v30
    %v35 = vshrl.u32 %v34, 7
    %v36 = vand.u32 %v34, 127
    %v37 = vsub.s32 0, %v36
    %v38 = vsel %vm32, %v37, %v36
    %vm39 = vcmp.lt.s32.totalorder %v31, 0
    %v40 = vsub.s32 0, %v31
    %v41 = vsel %vm39, %v40, %v31
    %v42 = vshrl.u32 %v41, 7
    %v43 = vand.u32 %v41, 127
    %v44 = vsub.s32 0, %v43
    %v45 = vsel %vm39, %v44, %v43
    %vm46 = vcmp.ne.s32.totalorder %v38, 0
    %vm47 = vcmp.ne.s32.totalorder %v45, 0
    %vm48 = vcmp.lt.s32.totalorder %v38, 0
    %vm49 = vcmp.lt.s32.totalorder %v45, 0
    %vm50 = vmand %vm48, %vm46
    %vm51 = vmand %vm49, %vm47
    %v52 = vadd.s32 %v38, 128
    %v53 = vadd.s32 %v45, 128
    %v54 = vsel %vm50, %v52, %v38
    %v55 = vsel %vm51, %v53, %v45
    %56 = vrot.lane.b32.xlu0 %v27, 4
    %v57 = vpop.permute.xlu0 %56
    %58 = vrot.lane.b32.xlu0 %v28, 4
    %v59 = vpop.permute.xlu0 %58
    %vm60 = vcmp.lt.s32.totalorder %v30, 4
    %v61 = vsel %vm60, %v57, %v59
    %v62 = vsel %vm60, %v59, %v57
    %vm63 = vcmp.ge.s32.totalorder %v54, 4
    %vm64 = vcmp.ge.s32.totalorder %v55, 4
    %v65 = vsel %vm63, %v62, 0.0
    %v66 = vsel %vm64, %v61, 0.0
    %67 = vrot.lane.b32.xlu0 %v27, 2
    %v68 = vpop.permute.xlu0 %67
    %69 = vrot.lane.b32.xlu0 %v28, 2
    %v70 = vpop.permute.xlu0 %69
    %vm71 = vcmp.lt.s32.totalorder %v30, 2
    %v72 = vsel %vm71, %v68, %v70
    %v73 = vsel %vm71, %v70, %v68
    %vm74 = vcmp.ge.s32.totalorder %v54, 2
    %vm75 = vcmp.ge.s32.totalorder %v55, 2
    %v76 = vsel %vm74, %v73, 0.0
    %v77 = vsel %vm75, %v72, 0.0
    %v78 = vld [vmem:[%s1] sm:$0xff]
    %v79 = vld [vmem:[%s2] sm:$0xff]
    %81 = vset.pattern.permute.xlu0 0
    %82 = vperm.xlu0 %81, %v79
    %v83 = vpop.permute.xlu0 %82
    %vm85 = vcmask 195584
    %v87 = vsel %vm85, %v78, 0
    %89 = vmatprep.subr.mxu0 %v66
    %90 = vmatpush1.msra.mxu0 %v65
    %91 = vmatprep.subr.mxu0 %v77
    %92 = vmatpush1.msra.mxu0 %v76
    %93 = vmatprep.subr.mxu0 %v28
    %94 = vmatpush1.msra.mxu0 %v27
    %95 = vmatprep.subr.mxu0 0.0
    %96 = vmatpush1.msra.mxu0 0.0
    %97 = vmatprep.subr.mxu0 0.0
    %98 = vmatpush1.msra.mxu0 0.0
    %99 = vmatprep.subr.mxu0 0.0
    %100 = vmatpush1.msra.mxu0 0.0
    %101 = vmatprep.subr.mxu0 0.0
    %102 = vmatpush1.msra.mxu0 0.0
    %103 = vmatprep.subr.mxu0 0.0
    %104 = vmatpush1.msra.mxu0 0.0
    %105 = vmatprep.subr.mxu0 0.0
    %106 = vmatpush1.msra.mxu0 0.0
    %107 = vmatprep.subr.mxu0 0.0
    %108 = vmatpush1.msra.mxu0 0.0
    %109 = vmatprep.subr.mxu0 0.0
    %110 = vmatpush1.msra.mxu0 0.0
    %111 = vmatprep.subr.mxu0 0.0
    %112 = vmatpush1.msra.mxu0 0.0
    %113 = vmatprep.subr.mxu0 0.0
    %114 = vmatpush1.msra.mxu0 0.0
    %115 = vmatprep.subr.mxu0 0.0
    %116 = vmatpush1.msra.mxu0 0.0
    %117 = vmatprep.subr.mxu0 0.0
    %118 = vmatpush1.msra.mxu0 0.0
    %119 = vmatprep.subr.mxu0 0.0
    %120 = vmatpush1.msra.mxu0 0.0
    %121 = vmatprep.subr.mxu0 0.0
    %122 = vmatpush1.msra.mxu0 0.0
    %123 = vmatprep.subr.mxu0 0.0
    %124 = vmatpush1.msra.mxu0 0.0
    %125 = vmatprep.subr.mxu0 0.0
    %126 = vmatpush1.msra.mxu0 0.0
    %127 = vmatprep.subr.mxu0 0.0
    %128 = vmatpush1.msra.mxu0 0.0
    %129 = vmatprep.subr.mxu0 0.0
    %130 = vmatpush1.msra.mxu0 0.0
    %131 = vmatprep.subr.mxu0 0.0
    %132 = vmatpush1.msra.mxu0 0.0
    %133 = vmatprep.subr.mxu0 0.0
    %134 = vmatpush1.msra.mxu0 0.0
    %135 = vmatprep.subr.mxu0 0.0
    %136 = vmatpush1.msra.mxu0 0.0
    %137 = vmatprep.subr.mxu0 0.0
    %138 = vmatpush1.msra.mxu0 0.0
    %139 = vmatprep.subr.mxu0 0.0
    %140 = vmatpush1.msra.mxu0 0.0
    %141 = vmatprep.subr.mxu0 0.0
    %142 = vmatpush1.msra.mxu0 0.0
    %143 = vmatprep.subr.mxu0 0.0
    %144 = vmatpush1.msra.mxu0 0.0
    %145 = vmatprep.subr.mxu0 0.0
    %146 = vmatpush1.msra.mxu0 0.0
    %147 = vmatprep.subr.mxu0 0.0
    %148 = vmatpush1.msra.mxu0 0.0
    %149 = vmatprep.subr.mxu0 0.0
    %150 = vmatpush1.msra.mxu0 0.0
    %151 = vmatprep.subr.mxu0 0.0
    %152 = vmatpush1.msra.mxu0 0.0
    %153 = vmatprep.mubr.f32.mxu0 0.0
    %154 = vmatmul.mubr.f32.gmra.mrb[0].mxu0 %v87
    %v155 = vpop.f32.mrb[0].mxu0
    %v156 = vadd.f32 %v83, %v155
    %v157 = vpop.f32.mrb[0].mxu0
    %v158 = vadd.f32 %v83, %v157
    %159 = vdwg.mxu0
    %v160 = vmax.f32 %v156, 0.0
    %v161 = vmax.f32 %v158, 0.0
    %v162 = vadd.f32 %v27, %v160
    %v163 = vadd.f32 %v28, %v161
    %164 = vst [vmem:[#allocation5] sm:$0xff] %v162
    %165 = vst [vmem:[#allocation5 + $0x8] sm:$0xff] %v163
    // Predicated region
    $region18: #{tpu_custom_call.1} parent=1 // pred_check
      _
    $region19: #{tpu_custom_call.1} parent=1 // pred_check_branch
      %167 = sbr.rel (0) target = $region21
    $region20: #{tpu_custom_call.1} parent=1 // pred_region
      %s169 = ssub.s32 256, 256
      %170 = vsyncadd [#allocation4], %s169
      %s172 = sshll.u32 [#allocation5], 4
      %s173 = int_to_ptr.vmem [resolvable:$true] %s172
      %175 = dma.vmem_to_hbm [thread:$0]  %s173, 256, %s3, [#allocation4]
    $region21: #{tpu_custom_call.1} parent=1 // pred_fallthru
      _
    // Predicated region
    $region22: #{tpu_custom_call.1} parent=1 // pred_check
      _
    $region23: #{tpu_custom_call.1} parent=1 // pred_check_branch
      %177 = sbr.rel (0) target = $region25
    $region24: #{tpu_custom_call.1} parent=1 // pred_region
      %178 = dma.done [#allocation4], 256
    $region25: #{tpu_custom_call.1} parent=1 // pred_fallthru
      _
    %179 = vsyncpa [#allocation3], 1
    %180 = vsyncpa [#allocation4], 1

</llo_original>
